<compile_context>
chip_gen: v7x
topology: tpu7x:2x2x1
jax: 0.10.0
libtpu: 0.0.40
codegen_flags: <defaults>
</compile_context>

<pallas_src>
import jax
import jax.numpy as jnp
from jax.experimental import pallas as pl
from jax.experimental.pallas import tpu as pltpu


def _round_up(x, m):
    return ((x + m - 1) // m) * m


def _choose_tb(batch):
    """Batch tile: >=2 grid steps when possible (v7x 2-TC), cap at 512."""
    b8 = _round_up(batch, 8)
    if b8 <= 8:
        return 8
    half = _round_up((b8 + 1) // 2, 8)
    return min(512, half)


def _mlp_kernel(x_ref, w1_ref, b1_ref, w2_ref, b2_ref, w3_ref, b3_ref, o_ref):
    c = o_ref.shape[-1]
    # Layer 1: (TB, D) bf16 @ (D, 256) bf16 -> f32, bias + ReLU in f32.
    x = x_ref[...].astype(jnp.bfloat16)
    h1 = jnp.maximum(
        jnp.dot(x, w1_ref[...], preferred_element_type=jnp.float32)
        + b1_ref[...], 0.0)
    # Layer 2: (TB, 256) bf16 @ (256, 128) bf16 -> f32, bias + ReLU in f32.
    h2 = jnp.maximum(
        jnp.dot(h1.astype(jnp.bfloat16), w2_ref[...],
                preferred_element_type=jnp.float32)
        + b2_ref[...], 0.0)
    # Layer 3: lane-dense (TB, C_pad) compute, narrow store of first C cols.
    logits_pad = jnp.dot(h2.astype(jnp.bfloat16), w3_ref[...],
                         preferred_element_type=jnp.float32)
    o_ref[...] = (logits_pad[:, :c] + b3_ref[...]).astype(o_ref.dtype)


def prepare_params(params):
    """One-time weight preprocessing: bf16 cast + lane-pad w3 to 128 lanes."""
    w1, b1, w2, b2, w3, b3 = params
    C = w3.shape[1]
    C_pad = _round_up(C, 128)
    w1_p = jnp.asarray(w1, jnp.float32).astype(jnp.bfloat16)        # (D, 256)
    w2_p = jnp.asarray(w2, jnp.float32).astype(jnp.bfloat16)        # (256, 128)
    w3_p = jnp.zeros((128, C_pad), jnp.bfloat16).at[:, :C].set(
        jnp.asarray(w3, jnp.float32).astype(jnp.bfloat16))          # (128, C_pad)
    b1_p = jnp.asarray(b1, jnp.float32).reshape(1, 256)
    b2_p = jnp.asarray(b2, jnp.float32).reshape(1, 128)
    b3_p = jnp.asarray(b3, jnp.float32).reshape(1, C)               # unpadded
    return (w1_p, b1_p, w2_p, b2_p, w3_p, b3_p)


@jax.jit
def nn_model_forward(x, prepared_params):
    """x: (B, num_keypoints, 2) f32. Returns logits (B, num_classes) f32."""
    w1_p, b1_p, w2_p, b2_p, w3_p, b3_p = prepared_params
    B = x.shape[0]
    x_flat = x.reshape(B, -1)                       # torch.flatten(x, 1)
    D = x_flat.shape[1]
    C = b3_p.shape[1]
    C_pad = w3_p.shape[1]

    TB = _choose_tb(B)
    grid = (pl.cdiv(B, TB),)

    return pl.pallas_call(
        _mlp_kernel,
        out_shape=jax.ShapeDtypeStruct((B, C), jnp.float32),
        grid=grid,
        in_specs=[
            # x tile marches along the batch; weights/biases stay resident.
            pl.BlockSpec((TB, D), lambda i: (i, 0)),      # x (unpadded K)
            pl.BlockSpec((D, 256), lambda i: (0, 0)),     # w1
            pl.BlockSpec((1, 256), lambda i: (0, 0)),     # b1
            pl.BlockSpec((256, 128), lambda i: (0, 0)),   # w2
            pl.BlockSpec((1, 128), lambda i: (0, 0)),     # b2
            pl.BlockSpec((128, C_pad), lambda i: (0, 0)), # w3 (lane-padded)
            pl.BlockSpec((1, C), lambda i: (0, 0)),       # b3 (unpadded)
        ],
        out_specs=pl.BlockSpec((TB, C), lambda i: (i, 0)),
        compiler_params=pltpu.CompilerParams(
            dimension_semantics=("parallel",),
        ),
    )(x_flat, w1_p, b1_p, w2_p, b2_p, w3_p, b3_p)


def init_params(key, num_keypoints, num_classes):
    """Deterministic synthetic parameters (nn.Linear shapes, stored (in, out))."""
    d_in = num_keypoints * 2
    ks = jax.random.split(key, 6)

    def uniform_like_torch(k, shape, fan_in):
        bound = 1.0 / jnp.sqrt(fan_in)
        return jax.random.uniform(k, shape, jnp.float32, -bound, bound)

    w1 = uniform_like_torch(ks[0], (d_in, 256), d_in)
    b1 = uniform_like_torch(ks[1], (1, 256), d_in)
    w2 = uniform_like_torch(ks[2], (256, 128), 256)
    b2 = uniform_like_torch(ks[3], (1, 128), 256)
    w3 = uniform_like_torch(ks[4], (128, num_classes), 128)
    b3 = uniform_like_torch(ks[5], (1, num_classes), 128)
    return (w1, b1, w2, b2, w3, b3)


def reference_forward(x, params, *, cast_bf16=False):
    """Pure-JAX reference. cast_bf16=True mirrors the kernel's bf16 operands
    with f32 accumulation."""
    w1, b1, w2, b2, w3, b3 = params
    h = x.reshape(x.shape[0], -1)
    if cast_bf16:
        h = h.astype(jnp.bfloat16)
        w1 = w1.astype(jnp.bfloat16)
        w2 = w2.astype(jnp.bfloat16)
        w3 = w3.astype(jnp.bfloat16)
    h = jnp.maximum(
        jnp.dot(h, w1, preferred_element_type=jnp.float32) + b1, 0.0)
    if cast_bf16:
        h = h.astype(jnp.bfloat16)
    h = jnp.maximum(
        jnp.dot(h, w2, preferred_element_type=jnp.float32) + b2, 0.0)
    if cast_bf16:
        h = h.astype(jnp.bfloat16)
    return jnp.dot(h, w3, preferred_element_type=jnp.float32) + b3


if __name__ == "__main__":
    num_keypoints = 16   # -> input dim 32
    num_classes = 8
    batch = 2

    key = jax.random.PRNGKey(0)
    k_x, k_p, k_x2 = jax.random.split(key, 3)
    params = init_params(k_p, num_keypoints, num_classes)
    prepared = prepare_params(params)

    # Primary small-batch run.
    x = jax.random.normal(k_x, (batch, num_keypoints, 2), jnp.float32)
    out = jax.block_until_ready(nn_model_forward(x, prepared))
    assert out.shape == (batch, num_classes)

    ref_bf16 = reference_forward(x, params, cast_bf16=True)
    assert jnp.allclose(out, ref_bf16, atol=1e-2, rtol=1e-2), (
        jnp.max(jnp.abs(out - ref_bf16)))
    ref_f32 = reference_forward(x, params, cast_bf16=False)
    assert jnp.allclose(out, ref_f32, atol=5e-2, rtol=5e-2), (
        jnp.max(jnp.abs(out - ref_f32)))

    # Secondary run: multi-tile grid with a ragged last batch tile.
    batch2 = 37
    x2 = jax.random.normal(k_x2, (batch2, num_keypoints, 2), jnp.float32)
    out2 = jax.block_until_ready(nn_model_forward(x2, prepared))
    assert out2.shape == (batch2, num_classes)
    ref2 = reference_forward(x2, params, cast_bf16=True)
    assert jnp.allclose(out2, ref2, atol=1e-2, rtol=1e-2), (
        jnp.max(jnp.abs(out2 - ref2)))

    print("KERNEL_OK")
</pallas_src>

<mosaic_0001>
module attributes {stable_mosaic.version = 11 : i64} {
  func.func @_mlp_kernel(%arg0: i32, %arg1: memref<8x32xf32, #tpu.memory_space<vmem>>, %arg2: memref<32x256xbf16, #tpu.memory_space<vmem>>, %arg3: memref<1x256xf32, #tpu.memory_space<vmem>>, %arg4: memref<256x128xbf16, #tpu.memory_space<vmem>>, %arg5: memref<1x128xf32, #tpu.memory_space<vmem>>, %arg6: memref<128x128xbf16, #tpu.memory_space<vmem>>, %arg7: memref<1x8xf32, #tpu.memory_space<vmem>>, %arg8: memref<8x8xf32, #tpu.memory_space<vmem>>) attributes {dimension_semantics = [#tpu.dimension_semantics<parallel>], iteration_bounds = array<i64: 1>, scalar_prefetch = 0 : i64, scratch_operands = 0 : i64, tpu.core_type = #tpu.core_type<tc>, window_params = [{transform_indices = @transform_0, window_bounds = array<i64: 8, 32>}, {pipeline_mode = #tpu.pipeline_mode<synchronous>, transform_indices = @transform_1, window_bounds = array<i64: 32, 256>}, {pipeline_mode = #tpu.pipeline_mode<synchronous>, transform_indices = @transform_2, window_bounds = array<i64: 1, 256>}, {pipeline_mode = #tpu.pipeline_mode<synchronous>, transform_indices = @transform_3, window_bounds = array<i64: 256, 128>}, {pipeline_mode = #tpu.pipeline_mode<synchronous>, transform_indices = @transform_4, window_bounds = array<i64: 1, 128>}, {pipeline_mode = #tpu.pipeline_mode<synchronous>, transform_indices = @transform_5, window_bounds = array<i64: 128, 128>}, {pipeline_mode = #tpu.pipeline_mode<synchronous>, transform_indices = @transform_6, window_bounds = array<i64: 1, 8>}, {transform_indices = @transform_7, window_bounds = array<i64: 8, 8>}]} {
    %c0 = arith.constant 0 : index
    %c0_0 = arith.constant 0 : index
    %0 = vector.load %arg1[%c0, %c0_0] : memref<8x32xf32, #tpu.memory_space<vmem>>, vector<8x32xf32>
    %1 = arith.truncf %0 : vector<8x32xf32> to vector<8x32xbf16>
    %c0_1 = arith.constant 0 : index
    %c0_2 = arith.constant 0 : index
    %2 = vector.load %arg2[%c0_1, %c0_2] : memref<32x256xbf16, #tpu.memory_space<vmem>>, vector<32x256xbf16>
    %cst = arith.constant dense<0.000000e+00> : vector<8x256xf32>
    %3 = tpu.matmul %1, %2, %cst {dimension_numbers = #tpu.dot_dimension_numbers<[1], [0], [0], [1], [0, 0, 1, 1], [], []>} : vector<8x32xbf16>, vector<32x256xbf16>, vector<8x256xf32> -> vector<8x256xf32>
    %c0_3 = arith.constant 0 : index
    %c0_4 = arith.constant 0 : index
    %4 = vector.load %arg3[%c0_3, %c0_4] : memref<1x256xf32, #tpu.memory_space<vmem>>, vector<1x256xf32>
    %5 = vector.broadcast %4 : vector<1x256xf32> to vector<8x256xf32>
    %6 = arith.addf %3, %5 : vector<8x256xf32>
    %cst_5 = arith.constant 0.000000e+00 : f32
    %7 = vector.broadcast %cst_5 : f32 to vector<8x256xf32>
    %8 = arith.maximumf %6, %7 : vector<8x256xf32>
    %9 = arith.truncf %8 : vector<8x256xf32> to vector<8x256xbf16>
    %c0_6 = arith.constant 0 : index
    %c0_7 = arith.constant 0 : index
    %10 = vector.load %arg4[%c0_6, %c0_7] : memref<256x128xbf16, #tpu.memory_space<vmem>>, vector<256x128xbf16>
    %cst_8 = arith.constant dense<0.000000e+00> : vector<8x128xf32>
    %11 = tpu.matmul %9, %10, %cst_8 {dimension_numbers = #tpu.dot_dimension_numbers<[1], [0], [0], [1], [0, 0, 1, 1], [], []>} : vector<8x256xbf16>, vector<256x128xbf16>, vector<8x128xf32> -> vector<8x128xf32>
    %c0_9 = arith.constant 0 : index
    %c0_10 = arith.constant 0 : index
    %12 = vector.load %arg5[%c0_9, %c0_10] : memref<1x128xf32, #tpu.memory_space<vmem>>, vector<1x128xf32>
    %13 = vector.broadcast %12 : vector<1x128xf32> to vector<8x128xf32>
    %14 = arith.addf %11, %13 : vector<8x128xf32>
    %cst_11 = arith.constant 0.000000e+00 : f32
    %15 = vector.broadcast %cst_11 : f32 to vector<8x128xf32>
    %16 = arith.maximumf %14, %15 : vector<8x128xf32>
    %17 = arith.truncf %16 : vector<8x128xf32> to vector<8x128xbf16>
    %c0_12 = arith.constant 0 : index
    %c0_13 = arith.constant 0 : index
    %18 = vector.load %arg6[%c0_12, %c0_13] : memref<128x128xbf16, #tpu.memory_space<vmem>>, vector<128x128xbf16>
    %cst_14 = arith.constant dense<0.000000e+00> : vector<8x128xf32>
    %19 = tpu.matmul %17, %18, %cst_14 {dimension_numbers = #tpu.dot_dimension_numbers<[1], [0], [0], [1], [0, 0, 1, 1], [], []>} : vector<8x128xbf16>, vector<128x128xbf16>, vector<8x128xf32> -> vector<8x128xf32>
    %20 = vector.extract_strided_slice %19 {offsets = [0, 0], sizes = [8, 8], strides = [1, 1]} : vector<8x128xf32> to vector<8x8xf32>
    %c0_15 = arith.constant 0 : index
    %c0_16 = arith.constant 0 : index
    %21 = vector.load %arg7[%c0_15, %c0_16] : memref<1x8xf32, #tpu.memory_space<vmem>>, vector<1x8xf32>
    %22 = vector.broadcast %21 : vector<1x8xf32> to vector<8x8xf32>
    %23 = arith.addf %20, %22 : vector<8x8xf32>
    %c0_17 = arith.constant 0 : index
    %c0_18 = arith.constant 0 : index
    %24 = vector.load %arg8[%c0_17, %c0_18] : memref<8x8xf32, #tpu.memory_space<vmem>>, vector<8x8xf32>
    tpu.vector_store %arg8[%c0_17, %c0_18], %23 {strides = array<i32>} : memref<8x8xf32, #tpu.memory_space<vmem>>, vector<8x8xf32>,
    return
  }
  func.func @transform_0(%arg0: i32) -> (i32, i32) {
    %c0_i32 = arith.constant 0 : i32
    %c0_i32_0 = arith.constant 0 : i32
    return %arg0, %c0_i32 : i32, i32
  }
  func.func @transform_1(%arg0: i32) -> (i32, i32) {
    %c0_i32 = arith.constant 0 : i32
    %c0_i32_0 = arith.constant 0 : i32
    %c0_i32_1 = arith.constant 0 : i32
    return %c0_i32, %c0_i32_0 : i32, i32
  }
  func.func @transform_2(%arg0: i32) -> (i32, i32) {
    %c0_i32 = arith.constant 0 : i32
    %c0_i32_0 = arith.constant 0 : i32
    %c0_i32_1 = arith.constant 0 : i32
    return %c0_i32, %c0_i32_0 : i32, i32
  }
  func.func @transform_3(%arg0: i32) -> (i32, i32) {
    %c0_i32 = arith.constant 0 : i32
    %c0_i32_0 = arith.constant 0 : i32
    %c0_i32_1 = arith.constant 0 : i32
    return %c0_i32, %c0_i32_0 : i32, i32
  }
  func.func @transform_4(%arg0: i32) -> (i32, i32) {
    %c0_i32 = arith.constant 0 : i32
    %c0_i32_0 = arith.constant 0 : i32
    %c0_i32_1 = arith.constant 0 : i32
    return %c0_i32, %c0_i32_0 : i32, i32
  }
  func.func @transform_5(%arg0: i32) -> (i32, i32) {
    %c0_i32 = arith.constant 0 : i32
    %c0_i32_0 = arith.constant 0 : i32
    %c0_i32_1 = arith.constant 0 : i32
    return %c0_i32, %c0_i32_0 : i32, i32
  }
  func.func @transform_6(%arg0: i32) -> (i32, i32) {
    %c0_i32 = arith.constant 0 : i32
    %c0_i32_0 = arith.constant 0 : i32
    %c0_i32_1 = arith.constant 0 : i32
    return %c0_i32, %c0_i32_0 : i32, i32
  }
  func.func @transform_7(%arg0: i32) -> (i32, i32) {
    %c0_i32 = arith.constant 0 : i32
    %c0_i32_0 = arith.constant 0 : i32
    return %arg0, %c0_i32 : i32, i32
  }
}

</mosaic_0001>

<llo_original>
// kernel: nn_model_forward.1
$region0: #{nn_model_forward.1}
  #allocation0 [shape = 'u32[]', space=smem, size = 0x4, offset = 0x4, fixed_abs, tag = 'smem constant byte address 0x4 - core index']
  #allocation1 [shape = 'u32[144,128]{1,0:T(1,128)}', space=vmem, size = 0x12000, scoped, tag = 'internal scratch']
  %s0 = inlined_call_operand.vmem [shape: f32[2,32], index: 0, kind: input, shape index: {}]
  %s1 = inlined_call_operand.hbm [shape: bf16[32,256], index: 1, kind: input, shape index: {}]
  %s2 = inlined_call_operand.vmem [shape: f32[1,256], index: 2, kind: input, shape index: {}]
  %s3 = inlined_call_operand.hbm [shape: bf16[256,128], index: 3, kind: input, shape index: {}]
  %s4 = inlined_call_operand.vmem [shape: f32[1,128], index: 4, kind: input, shape index: {}]
  %s5 = inlined_call_operand.vmem [shape: bf16[128,128], index: 5, kind: input, shape index: {}]
  %s6 = inlined_call_operand.vmem [shape: f32[1,8], index: 6, kind: input, shape index: {}]
  %s7 = inlined_call_operand.hbm [shape: f32[2,8], index: 7, kind: output, shape index: {}]
  %s8 = sld [smem:[#allocation0]]
  $region46: #{nn_model_forward.1} parent=0
    _
  %s10 = ssub.s32 1, %s8
  %s11 = scalar_select 0, %s10, %s8
  $region1: #{nn_model_forward.1} parent=0
    #allocation2 [shape = 'u8[16384]{0}', space=vmem, size = 0x4000, scoped, tag = 'input window, operand 1, single buffered']
    #allocation3 [shape = 's32[1]{0}', space=sflag, size = 0x4, scoped, tag = 'scoped memory for nn_model_forward.1']
    #allocation4 [shape = 's32[1]{0}', space=sflag, size = 0x4, scoped, tag = 'scoped memory for nn_model_forward.1']
    #allocation5 [shape = 'u8[65536]{0}', space=vmem, size = 0x10000, scoped, tag = 'input window, operand 3, single buffered']
    #allocation6 [shape = 's32[1]{0}', space=sflag, size = 0x4, scoped, tag = 'scoped memory for nn_model_forward.1']
    #allocation7 [shape = 'u8[4096]{0}', space=vmem, size = 0x1000, scoped, tag = 'output window, operand 0, single buffered']
    %12 = vsyncpa [#allocation3], 0
    %13 = vsyncpa [#allocation6], 0
    %14 = vsyncpa [#allocation4], 0
    // Predicated region
    $region2: #{nn_model_forward.1} parent=1 // pred_check
      _
    $region3: #{nn_model_forward.1} parent=1 // pred_check_branch
      %16 = sbr.rel (0) target = $region5
    $region4: #{nn_model_forward.1} parent=1 // pred_region
      _
    $region5: #{nn_model_forward.1} parent=1 // pred_fallthru
      _
    // Predicated region
    $region6: #{nn_model_forward.1} parent=1 // pred_check
      _
    $region7: #{nn_model_forward.1} parent=1 // pred_check_branch
      %18 = sbr.rel (0) target = $region9
    $region8: #{nn_model_forward.1} parent=1 // pred_region
      %s20 = ssub.s32 512, 512
      %21 = vsyncadd [#allocation3], %s20
      %s22 = sshll.u32 [#allocation2], 4
      %s23 = int_to_ptr.vmem [resolvable:$true] %s22
      %28 = dma.hbm_to_vmem [thread:$0]  %s1, 512, %s23, [#allocation3], 128, 128, 8
    $region9: #{nn_model_forward.1} parent=1 // pred_fallthru
      _
    // Predicated region
    $region10: #{nn_model_forward.1} parent=1 // pred_check
      _
    $region11: #{nn_model_forward.1} parent=1 // pred_check_branch
      %30 = sbr.rel (0) target = $region13
    $region12: #{nn_model_forward.1} parent=1 // pred_region
      _
    $region13: #{nn_model_forward.1} parent=1 // pred_fallthru
      _
    // Predicated region
    $region14: #{nn_model_forward.1} parent=1 // pred_check
      _
    $region15: #{nn_model_forward.1} parent=1 // pred_check_branch
      %32 = sbr.rel (0) target = $region17
    $region16: #{nn_model_forward.1} parent=1 // pred_region
      %s34 = ssub.s32 2048, 2048
      %35 = vsyncadd [#allocation6], %s34
      %s36 = sshll.u32 [#allocation5], 4
      %s37 = int_to_ptr.vmem [resolvable:$true] %s36
      %42 = dma.hbm_to_vmem [thread:$0]  %s3, 2048, %s37, [#allocation6], 64, 64, 4
    $region17: #{nn_model_forward.1} parent=1 // pred_fallthru
      _
    // Predicated region
    $region18: #{nn_model_forward.1} parent=1 // pred_check
      _
    $region19: #{nn_model_forward.1} parent=1 // pred_check_branch
      %44 = sbr.rel (0) target = $region21
    $region20: #{nn_model_forward.1} parent=1 // pred_region
      _
    $region21: #{nn_model_forward.1} parent=1 // pred_fallthru
      _
    // Predicated region
    $region22: #{nn_model_forward.1} parent=1 // pred_check
      _
    $region23: #{nn_model_forward.1} parent=1 // pred_check_branch
      %46 = sbr.rel (0) target = $region25
    $region24: #{nn_model_forward.1} parent=1 // pred_region
      _
    $region25: #{nn_model_forward.1} parent=1 // pred_fallthru
      _
    // Predicated region
    $region26: #{nn_model_forward.1} parent=1 // pred_check
      _
    $region27: #{nn_model_forward.1} parent=1 // pred_check_branch
      %48 = sbr.rel (0) target = $region29
    $region28: #{nn_model_forward.1} parent=1 // pred_region
      _
    $region29: #{nn_model_forward.1} parent=1 // pred_fallthru
      _
    // Predicated region
    $region30: #{nn_model_forward.1} parent=1 // pred_check
      _
    $region31: #{nn_model_forward.1} parent=1 // pred_check_branch
      %50 = sbr.rel (0) target = $region33
    $region32: #{nn_model_forward.1} parent=1 // pred_region
      %51 = dma.done [#allocation3], 512
    $region33: #{nn_model_forward.1} parent=1 // pred_fallthru
      _
    // Predicated region
    $region34: #{nn_model_forward.1} parent=1 // pred_check
      _
    $region35: #{nn_model_forward.1} parent=1 // pred_check_branch
      %53 = sbr.rel (0) target = $region37
    $region36: #{nn_model_forward.1} parent=1 // pred_region
      %54 = dma.done [#allocation6], 2048
    $region37: #{nn_model_forward.1} parent=1 // pred_fallthru
      _
    %v56 = vld [vmem:[%s0] sm:$0xff]
    %v57 = vpack.c.bf16 %v56, %v56
    %v58 = vld [vmem:[#allocation2] sm:$0xff]
    %v59 = vld [vmem:[#allocation2 + $0x8] sm:$0xff]
    %v60 = vld [vmem:[#allocation2 + $0x10] sm:$0xff]
    %v61 = vld [vmem:[#allocation2 + $0x18] sm:$0xff]
    %v62 = vld [vmem:[%s2] sm:$0x3]
    %v64 = vlaneseq
    %v65 = vshrl.u32 %v64, 7
    %v66 = vsub.s32 0, %v65
    %v67 = vrot.slane %v62, %v66
    %v68 = vlaneseq
    %v69 = vshrl.u32 %v68, 7
    %v70 = vsub.s32 1, %v69
    %v71 = vrot.slane %v62, %v70
    %v78 = vunpack.c.l.b16 %v58
    %v79 = vunpack.c.h.b16 %v58
    %v80 = vunpack.c.l.b16 %v59
    %v81 = vunpack.c.h.b16 %v59
    %v82 = vunpack.c.l.b16 %v60
    %v83 = vunpack.c.h.b16 %v60
    %v84 = vunpack.c.l.b16 %v61
    %v85 = vunpack.c.h.b16 %v61
    %v86 = vpack.c.b16 %v80, %v78
    %v87 = vpack.c.b16 %v81, %v79
    %v88 = vpack.c.b16 %v84, %v82
    %v89 = vpack.c.b16 %v85, %v83
    %vm94 = vcmask 261120
    %v96 = vsel %vm94, %v57, 0
    %98 = vmatprep.subr.bf16.mxu0 %v87
    %99 = vmatpush1.bf16.msra.mxu0 %v86
    %100 = vmatprep.subr.bf16.mxu0 %v89
    %101 = vmatpush1.bf16.msra.mxu0 %v88
    %102 = vmatprep.subr.bf16.mxu0 0
    %103 = vmatpush1.bf16.msra.mxu0 0
    %104 = vmatprep.subr.bf16.mxu0 0
    %105 = vmatpush1.bf16.msra.mxu0 0
    %106 = vmatprep.subr.bf16.mxu0 0
    %107 = vmatpush1.bf16.msra.mxu0 0
    %108 = vmatprep.subr.bf16.mxu0 0
    %109 = vmatpush1.bf16.msra.mxu0 0
    %110 = vmatprep.subr.bf16.mxu0 0
    %111 = vmatpush1.bf16.msra.mxu0 0
    %112 = vmatprep.subr.bf16.mxu0 0
    %113 = vmatpush1.bf16.msra.mxu0 0
    %114 = vmatprep.subr.bf16.mxu0 0
    %115 = vmatpush1.bf16.msra.mxu0 0
    %116 = vmatprep.subr.bf16.mxu0 0
    %117 = vmatpush1.bf16.msra.mxu0 0
    %118 = vmatprep.subr.bf16.mxu0 0
    %119 = vmatpush1.bf16.msra.mxu0 0
    %120 = vmatprep.subr.bf16.mxu0 0
    %121 = vmatpush1.bf16.msra.mxu0 0
    %122 = vmatprep.subr.bf16.mxu0 0
    %123 = vmatpush1.bf16.msra.mxu0 0
    %124 = vmatprep.subr.bf16.mxu0 0
    %125 = vmatpush1.bf16.msra.mxu0 0
    %126 = vmatprep.subr.bf16.mxu0 0
    %127 = vmatpush1.bf16.msra.mxu0 0
    %128 = vmatprep.subr.bf16.mxu0 0
    %129 = vmatpush1.bf16.msra.mxu0 0
    %130 = vmatprep.mubr.bf16.mxu0 0
    %131 = vmatmul.mubr.bf16.gmra.mrb[0].mxu0 %v96
    %v132 = vpop.f32.mrb[0].mxu0
    %v133 = vadd.f32 %v67, %v132
    %v134 = vpop.f32.mrb[0].mxu0
    %v135 = vadd.f32 %v71, %v134
    %v136 = vpop.f32.mrb[0].mxu0
    %v137 = vpop.f32.mrb[0].mxu0
    %138 = vdwg.mxu0
    %v139 = vmax.f32 %v133, 0.0
    %v140 = vmax.f32 %v135, 0.0
    %v141 = vpack.c.bf16 %v139, %v139
    %v142 = vpack.c.bf16 %v140, %v140
    %v143 = vld [vmem:[#allocation5] sm:$0xf]
    %v144 = vld [vmem:[#allocation5 + $0x4] sm:$0xf]
    %v145 = vld [vmem:[#allocation5 + $0x8] sm:$0xf]
    %v146 = vld [vmem:[#allocation5 + $0xc] sm:$0xf]
    %v147 = vld [vmem:[#allocation5 + $0x10] sm:$0xf]
    %v148 = vld [vmem:[#allocation5 + $0x14] sm:$0xf]
    %v149 = vld [vmem:[#allocation5 + $0x18] sm:$0xf]
    %v150 = vld [vmem:[#allocation5 + $0x1c] sm:$0xf]
    %v151 = vld [vmem:[#allocation5 + $0x20] sm:$0xf]
    %v152 = vld [vmem:[#allocation5 + $0x24] sm:$0xf]
    %v153 = vld [vmem:[#allocation5 + $0x28] sm:$0xf]
    %v154 = vld [vmem:[#allocation5 + $0x2c] sm:$0xf]
    %v155 = vld [vmem:[#allocation5 + $0x30] sm:$0xf]
    %v156 = vld [vmem:[#allocation5 + $0x34] sm:$0xf]
    %v157 = vld [vmem:[#allocation5 + $0x38] sm:$0xf]
    %v158 = vld [vmem:[#allocation5 + $0x3c] sm:$0xf]
    %v159 = vld [vmem:[#allocation5 + $0x40] sm:$0xf]
    %v160 = vld [vmem:[#allocation5 + $0x44] sm:$0xf]
    %v161 = vld [vmem:[#allocation5 + $0x48] sm:$0xf]
    %v162 = vld [vmem:[#allocation5 + $0x4c] sm:$0xf]
    %v163 = vld [vmem:[#allocation5 + $0x50] sm:$0xf]
    %v164 = vld [vmem:[#allocation5 + $0x54] sm:$0xf]
    %v165 = vld [vmem:[#allocation5 + $0x58] sm:$0xf]
    %v166 = vld [vmem:[#allocation5 + $0x5c] sm:$0xf]
    %v167 = vld [vmem:[#allocation5 + $0x60] sm:$0xf]
    %v168 = vld [vmem:[#allocation5 + $0x64] sm:$0xf]
    %v169 = vld [vmem:[#allocation5 + $0x68] sm:$0xf]
    %v170 = vld [vmem:[#allocation5 + $0x6c] sm:$0xf]
    %v171 = vld [vmem:[#allocation5 + $0x70] sm:$0xf]
    %v172 = vld [vmem:[#allocation5 + $0x74] sm:$0xf]
    %v173 = vld [vmem:[#allocation5 + $0x78] sm:$0xf]
    %v174 = vld [vmem:[#allocation5 + $0x7c] sm:$0xf]
    %v175 = vld [vmem:[%s4] sm:$0x1]
    %v177 = vlaneseq
    %v178 = vshrl.u32 %v177, 7
    %v179 = vsub.s32 0, %v178
    %v180 = vrot.slane %v175, %v179
    %v214 = vunpack.c.l.b16 %v143
    %v215 = vunpack.c.l.b16 %v144
    %v216 = vunpack.c.l.b16 %v145
    %v217 = vunpack.c.l.b16 %v146
    %v218 = vunpack.c.l.b16 %v147
    %v219 = vunpack.c.l.b16 %v148
    %v220 = vunpack.c.l.b16 %v149
    %v221 = vunpack.c.l.b16 %v150
    %v222 = vunpack.c.l.b16 %v151
    %v223 = vunpack.c.l.b16 %v152
    %v224 = vunpack.c.l.b16 %v153
    %v225 = vunpack.c.l.b16 %v154
    %v226 = vunpack.c.l.b16 %v155
    %v227 = vunpack.c.l.b16 %v156
    %v228 = vunpack.c.l.b16 %v157
    %v229 = vunpack.c.l.b16 %v158
    %v230 = vunpack.c.l.b16 %v159
    %v231 = vunpack.c.l.b16 %v160
    %v232 = vunpack.c.l.b16 %v161
    %v233 = vunpack.c.l.b16 %v162
    %v234 = vunpack.c.l.b16 %v163
    %v235 = vunpack.c.l.b16 %v164
    %v236 = vunpack.c.l.b16 %v165
    %v237 = vunpack.c.l.b16 %v166
    %v238 = vunpack.c.l.b16 %v167
    %v239 = vunpack.c.l.b16 %v168
    %v240 = vunpack.c.l.b16 %v169
    %v241 = vunpack.c.l.b16 %v170
    %v242 = vunpack.c.l.b16 %v171
    %v243 = vunpack.c.l.b16 %v172
    %v244 = vunpack.c.l.b16 %v173
    %v245 = vunpack.c.l.b16 %v174
    %v246 = vpack.c.b16 %v215, %v214
    %v247 = vpack.c.b16 %v217, %v216
    %v248 = vpack.c.b16 %v219, %v218
    %v249 = vpack.c.b16 %v221, %v220
    %v250 = vpack.c.b16 %v223, %v222
    %v251 = vpack.c.b16 %v225, %v224
    %v252 = vpack.c.b16 %v227, %v226
    %v253 = vpack.c.b16 %v229, %v228
    %v254 = vpack.c.b16 %v231, %v230
    %v255 = vpack.c.b16 %v233, %v232
    %v256 = vpack.c.b16 %v235, %v234
    %v257 = vpack.c.b16 %v237, %v236
    %v258 = vpack.c.b16 %v239, %v238
    %v259 = vpack.c.b16 %v241, %v240
    %v260 = vpack.c.b16 %v243, %v242
    %v261 = vpack.c.b16 %v245, %v244
    %278 = vmatprep.subr.bf16.mxu0 0
    %279 = vmatpush1.bf16.msra.mxu0 %v246
    %280 = vmatprep.subr.bf16.mxu0 0
    %281 = vmatpush1.bf16.msra.mxu0 %v247
    %282 = vmatprep.subr.bf16.mxu0 0
    %283 = vmatpush1.bf16.msra.mxu0 %v248
    %284 = vmatprep.subr.bf16.mxu0 0
    %285 = vmatpush1.bf16.msra.mxu0 %v249
    %286 = vmatprep.subr.bf16.mxu0 0
    %287 = vmatpush1.bf16.msra.mxu0 %v250
    %288 = vmatprep.subr.bf16.mxu0 0
    %289 = vmatpush1.bf16.msra.mxu0 %v251
    %290 = vmatprep.subr.bf16.mxu0 0
    %291 = vmatpush1.bf16.msra.mxu0 %v252
    %292 = vmatprep.subr.bf16.mxu0 0
    %293 = vmatpush1.bf16.msra.mxu0 %v253
    %294 = vmatprep.subr.bf16.mxu0 0
    %295 = vmatpush1.bf16.msra.mxu0 %v254
    %296 = vmatprep.subr.bf16.mxu0 0
    %297 = vmatpush1.bf16.msra.mxu0 %v255
    %298 = vmatprep.subr.bf16.mxu0 0
    %299 = vmatpush1.bf16.msra.mxu0 %v256
    %300 = vmatprep.subr.bf16.mxu0 0
    %301 = vmatpush1.bf16.msra.mxu0 %v257
    %302 = vmatprep.subr.bf16.mxu0 0
    %303 = vmatpush1.bf16.msra.mxu0 %v258
    %304 = vmatprep.subr.bf16.mxu0 0
    %305 = vmatpush1.bf16.msra.mxu0 %v259
    %306 = vmatprep.subr.bf16.mxu0 0
    %307 = vmatpush1.bf16.msra.mxu0 %v260
    %308 = vmatprep.subr.bf16.mxu0 0
    %309 = vmatpush1.bf16.msra.mxu0 %v261
    %310 = vmatprep.mubr.bf16.mxu0 %v142
    %311 = vmatmul.mubr.bf16.gmra.mrb[0].mxu0 %v141
    %v312 = vpop.f32.mrb[0].mxu0
    %v313 = vadd.f32 %v180, %v312
    %v314 = vpop.f32.mrb[0].mxu0
    %v315 = vpop.f32.mrb[0].mxu0
    %v316 = vpop.f32.mrb[0].mxu0
    %317 = vdwg.mxu0
    %v318 = vmax.f32 %v313, 0.0
    %v319 = vpack.c.bf16 %v318, %v318
    %v320 = vld [vmem:[%s5] sm:$0xf]
    %v321 = vld [vmem:[%s5 + $0x4] sm:$0xf]
    %v322 = vld [vmem:[%s5 + $0x8] sm:$0xf]
    %v323 = vld [vmem:[%s5 + $0xc] sm:$0xf]
    %v324 = vld [vmem:[%s5 + $0x10] sm:$0xf]
    %v325 = vld [vmem:[%s5 + $0x14] sm:$0xf]
    %v326 = vld [vmem:[%s5 + $0x18] sm:$0xf]
    %v327 = vld [vmem:[%s5 + $0x1c] sm:$0xf]
    %v328 = vld [vmem:[%s5 + $0x20] sm:$0xf]
    %v329 = vld [vmem:[%s5 + $0x24] sm:$0xf]
    %v330 = vld [vmem:[%s5 + $0x28] sm:$0xf]
    %v331 = vld [vmem:[%s5 + $0x2c] sm:$0xf]
    %v332 = vld [vmem:[%s5 + $0x30] sm:$0xf]
    %v333 = vld [vmem:[%s5 + $0x34] sm:$0xf]
    %v334 = vld [vmem:[%s5 + $0x38] sm:$0xf]
    %v335 = vld [vmem:[%s5 + $0x3c] sm:$0xf]
    %v352 = vunpack.c.l.b16 %v320
    %v353 = vunpack.c.l.b16 %v321
    %v354 = vunpack.c.l.b16 %v322
    %v355 = vunpack.c.l.b16 %v323
    %v356 = vunpack.c.l.b16 %v324
    %v357 = vunpack.c.l.b16 %v325
    %v358 = vunpack.c.l.b16 %v326
    %v359 = vunpack.c.l.b16 %v327
    %v360 = vunpack.c.l.b16 %v328
    %v361 = vunpack.c.l.b16 %v329
    %v362 = vunpack.c.l.b16 %v330
    %v363 = vunpack.c.l.b16 %v331
    %v364 = vunpack.c.l.b16 %v332
    %v365 = vunpack.c.l.b16 %v333
    %v366 = vunpack.c.l.b16 %v334
    %v367 = vunpack.c.l.b16 %v335
    %v368 = vpack.c.b16 %v353, %v352
    %v369 = vpack.c.b16 %v355, %v354
    %v370 = vpack.c.b16 %v357, %v356
    %v371 = vpack.c.b16 %v359, %v358
    %v372 = vpack.c.b16 %v361, %v360
    %v373 = vpack.c.b16 %v363, %v362
    %v374 = vpack.c.b16 %v365, %v364
    %v375 = vpack.c.b16 %v367, %v366
    %384 = vmatprep.subr.bf16.mxu0 0
    %385 = vmatpush1.bf16.msra.mxu0 %v368
    %386 = vmatprep.subr.bf16.mxu0 0
    %387 = vmatpush1.bf16.msra.mxu0 %v369
    %388 = vmatprep.subr.bf16.mxu0 0
    %389 = vmatpush1.bf16.msra.mxu0 %v370
    %390 = vmatprep.subr.bf16.mxu0 0
    %391 = vmatpush1.bf16.msra.mxu0 %v371
    %392 = vmatprep.subr.bf16.mxu0 0
    %393 = vmatpush1.bf16.msra.mxu0 %v372
    %394 = vmatprep.subr.bf16.mxu0 0
    %395 = vmatpush1.bf16.msra.mxu0 %v373
    %396 = vmatprep.subr.bf16.mxu0 0
    %397 = vmatpush1.bf16.msra.mxu0 %v374
    %398 = vmatprep.subr.bf16.mxu0 0
    %399 = vmatpush1.bf16.msra.mxu0 %v375
    %400 = vmatprep.subr.bf16.mxu0 0
    %401 = vmatpush1.bf16.msra.mxu0 0
    %402 = vmatprep.subr.bf16.mxu0 0
    %403 = vmatpush1.bf16.msra.mxu0 0
    %404 = vmatprep.subr.bf16.mxu0 0
    %405 = vmatpush1.bf16.msra.mxu0 0
    %406 = vmatprep.subr.bf16.mxu0 0
    %407 = vmatpush1.bf16.msra.mxu0 0
    %408 = vmatprep.subr.bf16.mxu0 0
    %409 = vmatpush1.bf16.msra.mxu0 0
    %410 = vmatprep.subr.bf16.mxu0 0
    %411 = vmatpush1.bf16.msra.mxu0 0
    %412 = vmatprep.subr.bf16.mxu0 0
    %413 = vmatpush1.bf16.msra.mxu0 0
    %414 = vmatprep.subr.bf16.mxu0 0
    %415 = vmatpush1.bf16.msra.mxu0 0
    %416 = vmatprep.mubr.bf16.mxu0 0
    %417 = vmatmul.mubr.bf16.gmra.mrb[0].mxu0 %v319
    %v418 = vpop.f32.mrb[0].mxu0
    %v419 = vadd.f32 0.0, %v418
    %v420 = vpop.f32.mrb[0].mxu0
    %v421 = vpop.f32.mrb[0].mxu0
    %v422 = vpop.f32.mrb[0].mxu0
    %423 = vdwg.mxu0
    %v424 = vld [vmem:[%s6] sm:$0x1]
    %v426 = vlaneseq
    %v427 = vshrl.u32 %v426, 7
    %v428 = vsub.s32 0, %v427
    %v429 = vrot.slane %v424, %v428
    %v431 = vadd.f32 %v419, %v429
    %vm432 = vcmask 64512
    %433 = vst.msk [vmem:[#allocation7] sm:$0xff] %vm432, %v431
    // Predicated region
    $region38: #{nn_model_forward.1} parent=1 // pred_check
      _
    $region39: #{nn_model_forward.1} parent=1 // pred_check_branch
      %435 = sbr.rel (0) target = $region41
    $region40: #{nn_model_forward.1} parent=1 // pred_region
      %s437 = ssub.s32 128, 32
      %438 = vsyncadd [#allocation4], %s437
      %s439 = sshll.u32 [#allocation7], 4
      %s440 = int_to_ptr.vmem [resolvable:$true] %s439
      %445 = dma.vmem_to_hbm [thread:$0]  %s440, 32, %s7, [#allocation4], 32, 32, 2
    $region41: #{nn_model_forward.1} parent=1 // pred_fallthru
      _
    // Predicated region
    $region42: #{nn_model_forward.1} parent=1 // pred_check
      _
    $region43: #{nn_model_forward.1} parent=1 // pred_check_branch
      %447 = sbr.rel (0) target = $region45
    $region44: #{nn_model_forward.1} parent=1 // pred_region
      %448 = dma.done [#allocation4], 128
    $region45: #{nn_model_forward.1} parent=1 // pred_fallthru
      _
    %449 = vsyncpa [#allocation3], 1
    %450 = vsyncpa [#allocation6], 1
    %451 = vsyncpa [#allocation4], 1

</llo_original>
